<compile_context>
chip_gen: v6e
topology: v6e:2x2x1
jax: 0.10.0
libtpu: 0.0.40
codegen_flags: <defaults>
</compile_context>

<pallas_src>
import functools

import numpy as np
import jax
import jax.numpy as jnp
from jax.experimental import pallas as pl
from jax.experimental.pallas import tpu as pltpu

EPS = 1e-6       # module epsilon
BN_EPS = 1e-5    # nn.BatchNorm2d default eps


def _pick_pixel_tile(hw, c_in, vmem_budget_bytes=8 << 20):
    """Largest lane-aligned tile (multiple of 128) dividing H*W whose
    double-buffered f32 x-tile stays within a conservative VMEM budget."""
    max_lanes = vmem_budget_bytes // (2 * 4 * max(c_in, 1))
    for cand in (8192, 4096, 2048, 1024, 512, 256, 128):
        if cand <= max_lanes and hw % cand == 0:
            return cand
    return hw  # full-extent block (valid: block dim equals array dim)


# --------- Pass 1: raw attention-logit statistics (for train-mode BN) -------
def _stats_kernel(x_ref, wa_ref, s_ref, ss_ref, sacc, ssacc):
    # x_ref : (1, C_in, T) — channels on sublanes, pixels on lanes.
    # wa_ref: (A, C_in)
    # s_ref, ss_ref: (1, A, 1) per-batch outputs; sacc/ssacc: (A, 1) scratch.
    t = pl.program_id(1)

    @pl.when(t == 0)
    def _init():
        sacc[...] = jnp.zeros_like(sacc)
        ssacc[...] = jnp.zeros_like(ssacc)

    x = x_ref[0]                                                       # (C_in, T)
    raw = jnp.dot(wa_ref[...], x, preferred_element_type=jnp.float32)  # (A, T)
    sacc[...] += jnp.sum(raw, axis=1, keepdims=True)                   # (A, 1)
    ssacc[...] += jnp.sum(raw * raw, axis=1, keepdims=True)            # (A, 1)

    @pl.when(t == pl.num_programs(1) - 1)
    def _finish():
        s_ref[0] = sacc[...]
        ss_ref[0] = ssacc[...]


# --------- Pass 2: fused conv + BN + sigmoid attention, weighted pooling ----
def _apply_kernel(x_ref, w_ref, b_ref, o_ref, wsum, asum, *, c_feat):
    # x_ref : (1, C_in, T); w_ref: (C_feat + A, C_in); b_ref: (C_feat + A, 1)
    # o_ref : (1, C_feat, 1); wsum: (C_feat, 1) scratch; asum: (A, 1) scratch.
    t = pl.program_id(1)

    @pl.when(t == 0)
    def _init():
        wsum[...] = jnp.zeros_like(wsum)
        asum[...] = jnp.zeros_like(asum)

    x = x_ref[0]                                                            # (C_in, T)
    y = jnp.dot(w_ref[...], x,
                preferred_element_type=jnp.float32) + b_ref[...]           # (C_feat+A, T)
    feats = y[:c_feat]                                                      # (C_feat, T)
    att = jax.nn.sigmoid(y[c_feat:])                                        # (A, T)
    weighted = feats * att                                                  # (C_feat, T)

    wsum[...] += jnp.sum(weighted, axis=1, keepdims=True)                   # (C_feat, 1)
    asum[...] += jnp.sum(att, axis=1, keepdims=True)                        # (A, 1)

    @pl.when(t == pl.num_programs(1) - 1)
    def _finish():
        o_ref[0] = wsum[...] / (asum[...] + EPS)                            # (C_feat, 1)


def adaptive_object_aware_pooling(x_nchw, wf, bf, wa, ba, gamma, beta):
    """x_nchw: (N, C_in, H, W) f32. wf: (C_feat, C_in), wa: (A, C_in).
    Returns (N, C_feat, 1, 1)."""
    n, c_in, h, w = x_nchw.shape
    c_feat = wf.shape[0]
    a = wa.shape[0]
    assert a == 1 or a == c_feat, "attention_channels must broadcast over features"
    hw = h * w
    t_pix = _pick_pixel_tile(hw, c_in)
    n_tiles = hw // t_pix

    # Free reshape: channels on sublanes, pixels on lanes. No HBM transpose.
    x3 = x_nchw.reshape(n, c_in, hw)

    const2 = lambda b, t: (0, 0)            # weights stay resident across the grid

    # ---------------- Pass 1: per-batch raw-logit sum / sum-of-squares ------
    s_out, ss_out = pl.pallas_call(
        _stats_kernel,
        out_shape=(jax.ShapeDtypeStruct((n, a, 1), jnp.float32),
                   jax.ShapeDtypeStruct((n, a, 1), jnp.float32)),
        grid_spec=pltpu.PrefetchScalarGridSpec(
            num_scalar_prefetch=0,
            grid=(n, n_tiles),
            in_specs=[
                pl.BlockSpec((1, c_in, t_pix), lambda b, t: (b, 0, t)),
                pl.BlockSpec((a, c_in), const2),
            ],
            out_specs=[
                pl.BlockSpec((1, a, 1), lambda b, t: (b, 0, 0)),
                pl.BlockSpec((1, a, 1), lambda b, t: (b, 0, 0)),
            ],
            scratch_shapes=[pltpu.VMEM((a, 1), jnp.float32),
                            pltpu.VMEM((a, 1), jnp.float32)],
        ),
        compiler_params=pltpu.CompilerParams(
            dimension_semantics=("parallel", "arbitrary")),
    )(x3, wa)

    # Train-mode BN statistics (biased variance) over raw logits wa@x.
    # The conv bias only shifts the mean; variance is unchanged, and the whole
    # BN affine folds into the attention conv:  sigmoid(wa_eff @ x + ba_eff).
    total = jnp.float32(n * hw)
    mean_raw = s_out.sum(axis=0).reshape(a) / total
    var = jnp.maximum(ss_out.sum(axis=0).reshape(a) / total - mean_raw * mean_raw, 0.0)
    scale = gamma * jax.lax.rsqrt(var + BN_EPS)
    wa_eff = wa * scale[:, None]
    ba_eff = beta - scale * mean_raw          # ba cancels: scale*(ba - (mean_raw+ba))+beta

    # Stack feature conv and attention conv into one matmul per tile.
    w_comb = jnp.concatenate([wf, wa_eff], axis=0).astype(jnp.float32)        # (C_feat+A, C_in)
    b_comb = jnp.concatenate([bf, ba_eff], axis=0).reshape(c_feat + a, 1)     # (C_feat+A, 1)

    # ---------------- Pass 2: apply attention + adaptive pooling ------------
    out = pl.pallas_call(
        functools.partial(_apply_kernel, c_feat=c_feat),
        out_shape=jax.ShapeDtypeStruct((n, c_feat, 1), jnp.float32),
        grid_spec=pltpu.PrefetchScalarGridSpec(
            num_scalar_prefetch=0,
            grid=(n, n_tiles),
            in_specs=[
                pl.BlockSpec((1, c_in, t_pix), lambda b, t: (b, 0, t)),
                pl.BlockSpec((c_feat + a, c_in), const2),
                pl.BlockSpec((c_feat + a, 1), const2),
            ],
            out_specs=pl.BlockSpec((1, c_feat, 1), lambda b, t: (b, 0, 0)),
            scratch_shapes=[pltpu.VMEM((c_feat, 1), jnp.float32),
                            pltpu.VMEM((a, 1), jnp.float32)],
        ),
        compiler_params=pltpu.CompilerParams(
            dimension_semantics=("parallel", "arbitrary")),
    )(x3, w_comb, b_comb)

    return out.reshape(n, c_feat, 1, 1)


def _reference(x_nchw, wf, bf, wa, ba, gamma, beta):
    """Pure-JAX reference mirroring the PyTorch forward (train-mode BN)."""
    feats = jnp.einsum('nchw,fc->nfhw', x_nchw, wf) + bf[None, :, None, None]
    logits = jnp.einsum('nchw,ac->nahw', x_nchw, wa) + ba[None, :, None, None]
    mean = jnp.mean(logits, axis=(0, 2, 3), keepdims=True)
    var = jnp.mean((logits - mean) ** 2, axis=(0, 2, 3), keepdims=True)
    att = jax.nn.sigmoid((logits - mean) / jnp.sqrt(var + BN_EPS)
                         * gamma[None, :, None, None] + beta[None, :, None, None])
    weighted = feats * att
    out = weighted.sum(axis=(2, 3)) / (att.sum(axis=(2, 3)) + EPS)
    return out[:, :, None, None]


if __name__ == "__main__":
    N, C_IN, H, W = 2, 4, 16, 16
    C_FEAT, A = 8, 1   # attention_channels=1 (module default)

    key = jax.random.PRNGKey(0)
    k_x, k_wf, k_bf, k_wa, k_ba = jax.random.split(key, 5)

    x = jax.random.normal(k_x, (N, C_IN, H, W), dtype=jnp.float32)

    # pre_layer_features: Conv2d(C_IN, C_FEAT, 1) weights as (C_out, C_in).
    wf = jax.random.normal(k_wf, (C_FEAT, C_IN), dtype=jnp.float32) * 0.1
    bf = jax.random.normal(k_bf, (C_FEAT,), dtype=jnp.float32) * 0.1
    # attention: Conv2d(C_IN, A, 1) weights as (A, C_in).
    wa = jax.random.normal(k_wa, (A, C_IN), dtype=jnp.float32) * 0.1
    ba = jax.random.normal(k_ba, (A,), dtype=jnp.float32) * 0.1
    # BatchNorm2d(A) affine params (fresh init: gamma=1, beta=0).
    gamma = jnp.ones((A,), dtype=jnp.float32)
    beta = jnp.zeros((A,), dtype=jnp.float32)

    out = adaptive_object_aware_pooling(x, wf, bf, wa, ba, gamma, beta)
    out = jax.block_until_ready(out)

    ref = _reference(x, wf, bf, wa, ba, gamma, beta)
    assert out.shape == (N, C_FEAT, 1, 1), out.shape
    np.testing.assert_allclose(np.asarray(out), np.asarray(ref), rtol=1e-4, atol=1e-5)

    print("KERNEL_OK")
</pallas_src>

<mosaic_0001>
module attributes {stable_mosaic.version = 11 : i64} {
  func.func @_stats_kernel(%arg0: i32, %arg1: i32, %arg2: memref<1x4x256xf32, #tpu.memory_space<vmem>>, %arg3: memref<1x4xf32, #tpu.memory_space<vmem>>, %arg4: memref<1x1x1xf32, #tpu.memory_space<vmem>>, %arg5: memref<1x1x1xf32, #tpu.memory_space<vmem>>, %arg6: memref<1x1xf32, #tpu.memory_space<vmem>>, %arg7: memref<1x1xf32, #tpu.memory_space<vmem>>) attributes {dimension_semantics = [#tpu.dimension_semantics<parallel>, #tpu.dimension_semantics<arbitrary>], iteration_bounds = array<i64: 2, 1>, scalar_prefetch = 0 : i64, scratch_operands = 2 : i64, tpu.core_type = #tpu.core_type<tc>, window_params = [{transform_indices = @transform_0, window_bounds = array<i64: 1, 4, 256>}, {pipeline_mode = #tpu.pipeline_mode<synchronous>, transform_indices = @transform_1, window_bounds = array<i64: 1, 4>}, {transform_indices = @transform_2, window_bounds = array<i64: 1, 1, 1>}, {transform_indices = @transform_3, window_bounds = array<i64: 1, 1, 1>}]} {
    %c0_i32 = arith.constant 0 : i32
    %0 = arith.cmpi eq, %arg1, %c0_i32 : i32
    %1 = arith.extui %0 : i1 to i32
    %c0_i32_0 = arith.constant 0 : i32
    %2 = arith.cmpi ne, %1, %c0_i32_0 : i32
    scf.if %2 {
      %cst_17 = arith.constant 0.000000e+00 : f32
      %21 = vector.broadcast %cst_17 : f32 to vector<1x1xf32>
      %c0_18 = arith.constant 0 : index
      %c0_19 = arith.constant 0 : index
      %22 = vector.load %arg6[%c0_18, %c0_19] : memref<1x1xf32, #tpu.memory_space<vmem>>, vector<1x1xf32>
      tpu.vector_store %arg6[%c0_18, %c0_19], %21 {strides = array<i32>} : memref<1x1xf32, #tpu.memory_space<vmem>>, vector<1x1xf32>,
      %cst_20 = arith.constant 0.000000e+00 : f32
      %23 = vector.broadcast %cst_20 : f32 to vector<1x1xf32>
      %c0_21 = arith.constant 0 : index
      %c0_22 = arith.constant 0 : index
      %24 = vector.load %arg7[%c0_21, %c0_22] : memref<1x1xf32, #tpu.memory_space<vmem>>, vector<1x1xf32>
      tpu.vector_store %arg7[%c0_21, %c0_22], %23 {strides = array<i32>} : memref<1x1xf32, #tpu.memory_space<vmem>>, vector<1x1xf32>,
    } else {
    }
    %c0 = arith.constant 0 : index
    %c0_1 = arith.constant 0 : index
    %c0_2 = arith.constant 0 : index
    %3 = vector.load %arg2[%c0, %c0_1, %c0_2] : memref<1x4x256xf32, #tpu.memory_space<vmem>>, vector<1x4x256xf32>
    %4 = vector.shape_cast %3 : vector<1x4x256xf32> to vector<4x256xf32>
    %c0_3 = arith.constant 0 : index
    %c0_4 = arith.constant 0 : index
    %5 = vector.load %arg3[%c0_3, %c0_4] : memref<1x4xf32, #tpu.memory_space<vmem>>, vector<1x4xf32>
    %cst = arith.constant dense<0.000000e+00> : vector<1x256xf32>
    %6 = tpu.matmul %5, %4, %cst {dimension_numbers = #tpu.dot_dimension_numbers<[1], [0], [0], [1], [0, 0, 1, 1], [], []>} : vector<1x4xf32>, vector<4x256xf32>, vector<1x256xf32> -> vector<1x256xf32>
    %c0_5 = arith.constant 0 : index
    %c0_6 = arith.constant 0 : index
    %7 = vector.load %arg6[%c0_5, %c0_6] : memref<1x1xf32, #tpu.memory_space<vmem>>, vector<1x1xf32>
    %cst_7 = arith.constant dense<0.000000e+00> : vector<1xf32>
    %8 = vector.multi_reduction <add>, %6, %cst_7 [1] : vector<1x256xf32> to vector<1xf32>
    %9 = vector.shape_cast %8 : vector<1xf32> to vector<1x1xf32>
    %10 = arith.addf %7, %9 : vector<1x1xf32>
    %c0_8 = arith.constant 0 : index
    %c0_9 = arith.constant 0 : index
    %11 = vector.load %arg6[%c0_8, %c0_9] : memref<1x1xf32, #tpu.memory_space<vmem>>, vector<1x1xf32>
    tpu.vector_store %arg6[%c0_8, %c0_9], %10 {strides = array<i32>} : memref<1x1xf32, #tpu.memory_space<vmem>>, vector<1x1xf32>,
    %c0_10 = arith.constant 0 : index
    %c0_11 = arith.constant 0 : index
    %12 = vector.load %arg7[%c0_10, %c0_11] : memref<1x1xf32, #tpu.memory_space<vmem>>, vector<1x1xf32>
    %13 = arith.mulf %6, %6 : vector<1x256xf32>
    %cst_12 = arith.constant dense<0.000000e+00> : vector<1xf32>
    %14 = vector.multi_reduction <add>, %13, %cst_12 [1] : vector<1x256xf32> to vector<1xf32>
    %15 = vector.shape_cast %14 : vector<1xf32> to vector<1x1xf32>
    %16 = arith.addf %12, %15 : vector<1x1xf32>
    %c0_13 = arith.constant 0 : index
    %c0_14 = arith.constant 0 : index
    %17 = vector.load %arg7[%c0_13, %c0_14] : memref<1x1xf32, #tpu.memory_space<vmem>>, vector<1x1xf32>
    tpu.vector_store %arg7[%c0_13, %c0_14], %16 {strides = array<i32>} : memref<1x1xf32, #tpu.memory_space<vmem>>, vector<1x1xf32>,
    %c0_i32_15 = arith.constant 0 : i32
    %18 = arith.cmpi eq, %arg1, %c0_i32_15 : i32
    %19 = arith.extui %18 : i1 to i32
    %c0_i32_16 = arith.constant 0 : i32
    %20 = arith.cmpi ne, %19, %c0_i32_16 : i32
    scf.if %20 {
      %c0_17 = arith.constant 0 : index
      %c0_18 = arith.constant 0 : index
      %21 = vector.load %arg6[%c0_17, %c0_18] : memref<1x1xf32, #tpu.memory_space<vmem>>, vector<1x1xf32>
      %c0_19 = arith.constant 0 : index
      %c0_20 = arith.constant 0 : index
      %c0_21 = arith.constant 0 : index
      %22 = vector.load %arg4[%c0_19, %c0_20, %c0_21] : memref<1x1x1xf32, #tpu.memory_space<vmem>>, vector<1x1x1xf32>
      %23 = vector.shape_cast %22 : vector<1x1x1xf32> to vector<1x1xf32>
      %24 = vector.shape_cast %21 : vector<1x1xf32> to vector<1x1x1xf32>
      tpu.vector_store %arg4[%c0_19, %c0_20, %c0_21], %24 {strides = array<i32>} : memref<1x1x1xf32, #tpu.memory_space<vmem>>, vector<1x1x1xf32>,
      %c0_22 = arith.constant 0 : index
      %c0_23 = arith.constant 0 : index
      %25 = vector.load %arg7[%c0_22, %c0_23] : memref<1x1xf32, #tpu.memory_space<vmem>>, vector<1x1xf32>
      %c0_24 = arith.constant 0 : index
      %c0_25 = arith.constant 0 : index
      %c0_26 = arith.constant 0 : index
      %26 = vector.load %arg5[%c0_24, %c0_25, %c0_26] : memref<1x1x1xf32, #tpu.memory_space<vmem>>, vector<1x1x1xf32>
      %27 = vector.shape_cast %26 : vector<1x1x1xf32> to vector<1x1xf32>
      %28 = vector.shape_cast %25 : vector<1x1xf32> to vector<1x1x1xf32>
      tpu.vector_store %arg5[%c0_24, %c0_25, %c0_26], %28 {strides = array<i32>} : memref<1x1x1xf32, #tpu.memory_space<vmem>>, vector<1x1x1xf32>,
    } else {
    }
    return
  }
  func.func @transform_0(%arg0: i32, %arg1: i32) -> (i32, i32, i32) {
    %c0_i32 = arith.constant 0 : i32
    %c0_i32_0 = arith.constant 0 : i32
    return %arg0, %c0_i32, %arg1 : i32, i32, i32
  }
  func.func @transform_1(%arg0: i32, %arg1: i32) -> (i32, i32) {
    %c0_i32 = arith.constant 0 : i32
    %c0_i32_0 = arith.constant 0 : i32
    %c0_i32_1 = arith.constant 0 : i32
    return %c0_i32, %c0_i32_0 : i32, i32
  }
  func.func @transform_2(%arg0: i32, %arg1: i32) -> (i32, i32, i32) {
    %c0_i32 = arith.constant 0 : i32
    %c0_i32_0 = arith.constant 0 : i32
    %c0_i32_1 = arith.constant 0 : i32
    return %arg0, %c0_i32, %c0_i32_0 : i32, i32, i32
  }
  func.func @transform_3(%arg0: i32, %arg1: i32) -> (i32, i32, i32) {
    %c0_i32 = arith.constant 0 : i32
    %c0_i32_0 = arith.constant 0 : i32
    %c0_i32_1 = arith.constant 0 : i32
    return %arg0, %c0_i32, %c0_i32_0 : i32, i32, i32
  }
}

</mosaic_0001>

<llo_original>
// kernel: tpu_custom_call.1
$region0: #{tpu_custom_call.1}
  #allocation0 [shape = 'u32[]', space=smem, size = 0x4, offset = 0x4, fixed_abs, tag = 'smem constant byte address 0x4 - core index']
  #allocation1 [shape = 'u32[144,128]{1,0:T(1,128)}', space=vmem, size = 0x12000, scoped, tag = 'internal scratch']
  #allocation2 [shape = 'f32[1,1]{1,0:T(1,128)}', space=vmem, size = 0x200, scoped, tag = 'scratch operand']
  #allocation3 [shape = 'f32[1,1]{1,0:T(1,128)}', space=vmem, size = 0x200, scoped, tag = 'scratch operand']
  %s0 = inlined_call_operand.hbm [shape: f32[2,4,256], index: 0, kind: input, shape index: {}]
  %s1 = inlined_call_operand.vmem [shape: f32[1,4], index: 1, kind: input, shape index: {}]
  %s2 = inlined_call_operand.vmem [shape: f32[2,1,1], index: 2, kind: output, shape index: {0}]
  %s3 = inlined_call_operand.vmem [shape: f32[2,1,1], index: 3, kind: output, shape index: {1}]
  %4 = xla_tuple %s2, %s3
  %s5 = sld [smem:[#allocation0]]
  $region61: #{tpu_custom_call.1} parent=0
    _
  %s7 = ssub.s32 1, %s5
  %s8 = scalar_select 0, %s7, %s5
  $region1: #{tpu_custom_call.1} parent=0
    #allocation4 [shape = 'u8[8192]{0}', space=vmem, size = 0x2000, scoped, tag = 'input window, operand 0']
    #allocation5 [shape = 's32[2]{0}', space=sflag, size = 0x8, scoped, tag = 'scoped memory for tpu_custom_call.1']
    %9 = vsyncpa [#allocation5], 0
    %s10 = scalar_lea.sflag [#allocation5], 1
    %11 = vsyncpa %s10, 0
    loop: start=0, step=1, limit=4
    $region2: #{tpu_custom_call.1} parent=1 // loop_pre_header
      _
    $region3: #{tpu_custom_call.1} parent=1 // loop_header
      %s13 = sphi 0, %s17
      %p14 = scmp.ge.s32.totalorder %s13, 4
      %s20 = sphi 0, %s32
      %s21 = sphi 0, %s28
      %s22 = sphi 0, %s20
      %s23 = sphi 0, %s21
      %s24 = sphi 0, %s22
      %s25 = sphi 0, %s23
      %s37 = sphi 0, %s39
      %s40 = sphi 0, %s37
      %s41 = sphi 0, %s40
      %s57 = sphi 0, %s41
      %s61 = sphi 0, %s61
      %s63 = sphi 0, %s61
      %s64 = sphi 0, %s63
      %s78 = sphi 0, %s64
      %s84 = sphi 0, %s86
      %s87 = sphi 0, %s84
      %s88 = sphi 0, %s87
      %s104 = sphi 0, %s88
      %s110 = sphi 0, %s112
      %s113 = sphi 0, %s110
      %s114 = sphi 0, %s113
      %s130 = sphi 0, %s114
    $region4: #{tpu_custom_call.1} parent=1 // loop_header_branch
      %16 = sbr.rel (%p14) target = $region8
    $region5: #{tpu_custom_call.1} parent=1 // loop_body
      %s18 = ssub.s32 %s13, 1
      %s19 = ssub.s32 %s13, 2
      %s26 = sadd.s32 1, %s21
      %p27 = scmp.ge.s32.totalorder %s26, 1
      %s28 = scalar_select %p27, 0, %s26
      %s29 = sadd.s32 1, %s20
      %s30 = scalar_select %p27, %s29, %s20
      %p31 = scmp.ge.s32.totalorder %s30, 2
      %s32 = scalar_select %p31, 0, %s30
      %s33 = ssub.s32 %s20, %s32
      %s34 = ssub.s32 %s21, %s28
      %s35 = sor.u32 %s33, %s34
      %p36 = scmp.eq.s32.totalorder %s35, 0
      %s38 = sadd.s32 %s37, 1
      %s39 = scalar_select %p36, %s37, %s38
      %p42 = pneg %p36
      %p43 = scmp.eq.s32.totalorder %s13, 1
      %p44 = por %p42, %p43
      %p45 = scmp.ne.s32.totalorder %s37, %s40
      %p46 = scmp.eq.s32.totalorder %s13, 0
      %p47 = por %p45, %p46
      %p48 = scmp.ne.s32.totalorder %s37, %s40
      %p49 = scmp.eq.s32.totalorder %s18, 1
      %p50 = por %p48, %p49
      %p51 = scmp.ne.s32.totalorder %s40, %s41
      %p52 = scmp.eq.s32.totalorder %s18, 0
      %p53 = por %p51, %p52
      %p54 = scmp.ne.s32.totalorder %s40, %s41
      %p55 = scmp.eq.s32.totalorder %s19, 1
      %p56 = por %p54, %p55
      %p58 = scmp.ne.s32.totalorder %s41, %s57
      %p59 = scmp.eq.s32.totalorder %s19, 0
      %p60 = por %p58, %p59
      %s62 = sadd.s32 %s61, 1
      %p65 = scmp.eq.s32.totalorder %s13, 1
      %p66 = scmp.ne.s32.totalorder %s61, %s63
      %p67 = scmp.eq.s32.totalorder %s13, 0
      %p68 = por %p66, %p67
      %p69 = scmp.ne.s32.totalorder %s61, %s63
      %p70 = scmp.eq.s32.totalorder %s18, 1
      %p71 = por %p69, %p70
      %p72 = scmp.ne.s32.totalorder %s63, %s64
      %p73 = scmp.eq.s32.totalorder %s18, 0
      %p74 = por %p72, %p73
      %p75 = scmp.ne.s32.totalorder %s63, %s64
      %p76 = scmp.eq.s32.totalorder %s19, 1
      %p77 = por %p75, %p76
      %p79 = scmp.ne.s32.totalorder %s64, %s78
      %p80 = scmp.eq.s32.totalorder %s19, 0
      %p81 = por %p79, %p80
      %s82 = ssub.s32 %s20, %s32
      %p83 = scmp.eq.s32.totalorder %s82, 0
      %s85 = sadd.s32 %s84, 1
      %s86 = scalar_select %p83, %s84, %s85
      %p89 = pneg %p83
      %p90 = scmp.eq.s32.totalorder %s13, 1
      %p91 = por %p89, %p90
      %p92 = scmp.ne.s32.totalorder %s84, %s87
      %p93 = scmp.eq.s32.totalorder %s13, 0
      %p94 = por %p92, %p93
      %p95 = scmp.ne.s32.totalorder %s84, %s87
      %p96 = scmp.eq.s32.totalorder %s18, 1
      %p97 = por %p95, %p96
      %p98 = scmp.ne.s32.totalorder %s87, %s88
      %p99 = scmp.eq.s32.totalorder %s18, 0
      %p100 = por %p98, %p99
      %p101 = scmp.ne.s32.totalorder %s87, %s88
      %p102 = scmp.eq.s32.totalorder %s19, 1
      %p103 = por %p101, %p102
      %p105 = scmp.ne.s32.totalorder %s88, %s104
      %p106 = scmp.eq.s32.totalorder %s19, 0
      %p107 = por %p105, %p106
      %s108 = ssub.s32 %s20, %s32
      %p109 = scmp.eq.s32.totalorder %s108, 0
      %s111 = sadd.s32 %s110, 1
      %s112 = scalar_select %p109, %s110, %s111
      %p115 = pneg %p109
      %p116 = scmp.eq.s32.totalorder %s13, 1
      %p117 = por %p115, %p116
      %p118 = scmp.ne.s32.totalorder %s110, %s113
      %p119 = scmp.eq.s32.totalorder %s13, 0
      %p120 = por %p118, %p119
      %p121 = scmp.ne.s32.totalorder %s110, %s113
      %p122 = scmp.eq.s32.totalorder %s18, 1
      %p123 = por %p121, %p122
      %p124 = scmp.ne.s32.totalorder %s113, %s114
      %p125 = scmp.eq.s32.totalorder %s18, 0
      %p126 = por %p124, %p125
      %p127 = scmp.ne.s32.totalorder %s113, %s114
      %p128 = scmp.eq.s32.totalorder %s19, 1
      %p129 = por %p127, %p128
      %p131 = scmp.ne.s32.totalorder %s114, %s130
      %p132 = scmp.eq.s32.totalorder %s19, 0
      %p133 = por %p131, %p132
      %p134 = scmp.le.s32.totalorder 1, %s13
      %p135 = scmp.lt.s32.totalorder %s13, 3
      %p136 = pnand %p134, %p135
      %p137 = pneg %p136
      // Predicated region
      $region9: #{tpu_custom_call.1} parent=5 // pred_check
        _
      $region10: #{tpu_custom_call.1} parent=5 // pred_check_branch
        %139 = sbr.rel (%p136) target = $region12
      $region11: #{tpu_custom_call.1} parent=5 // pred_region
        %s140 = ssub.s32 %s13, 1
        // Predicated region
        $region13: #{tpu_custom_call.1} parent=11 // pred_check
          %p141 = pneg %p74
        $region14: #{tpu_custom_call.1} parent=11 // pred_check_branch
          %143 = sbr.rel (%p141) target = $region16
        $region15: #{tpu_custom_call.1} parent=11 // pred_region
          _
        $region16: #{tpu_custom_call.1} parent=11 // pred_fallthru
          _
      $region12: #{tpu_custom_call.1} parent=5 // pred_fallthru
        _
      %p144 = scmp.lt.s32.totalorder %s13, 2
      // Predicated region
      $region17: #{tpu_custom_call.1} parent=5 // pred_check
        %p145 = pneg %p144
      $region18: #{tpu_custom_call.1} parent=5 // pred_check_branch
        %147 = sbr.rel (%p145) target = $region20
      $region19: #{tpu_custom_call.1} parent=5 // pred_region
        // Predicated region
        $region21: #{tpu_custom_call.1} parent=19 // pred_check
          %p148 = pneg %p47
        $region22: #{tpu_custom_call.1} parent=19 // pred_check_branch
          %150 = sbr.rel (%p148) target = $region24
        $region23: #{tpu_custom_call.1} parent=19 // pred_region
          %s151 = sand.u32 %s37, 1
          %s152 = scalar_lea.sflag [#allocation5], %s151
          %s153 = sand.u32 %s37, 1
          %s154 = smul.addr %s153, 8
          %s155 = scalar_lea.vmem [#allocation4], %s154
          %s156 = smul.u32 2, %s21
          %s158 = ssub.s32 128, 128
          %159 = vsyncadd %s152, %s158
          %s160 = smul.addr %s20, 2
          %s161 = sadd.s32 %s156, %s160
          %s162 = smul.addr %s161, 64
          %s163 = scalar_lea.hbm %s0, %s162
          %s165 = sshll.u32 %s155, 4
          %s166 = int_to_ptr.vmem [resolvable:$true] %s165
          %168 = dma.hbm_to_vmem [thread:$0]  %s163, 128, %s166, %s152
        $region24: #{tpu_custom_call.1} parent=19 // pred_fallthru
          _
      $region20: #{tpu_custom_call.1} parent=5 // pred_fallthru
        _
      %p169 = scmp.le.s32.totalorder 1, %s13
      %p170 = scmp.lt.s32.totalorder %s13, 3
      %p171 = pnand %p169, %p170
      %p172 = pneg %p171
      // Predicated region
      $region25: #{tpu_custom_call.1} parent=5 // pred_check
        _
      $region26: #{tpu_custom_call.1} parent=5 // pred_check_branch
        %174 = sbr.rel (%p171) target = $region28
      $region27: #{tpu_custom_call.1} parent=5 // pred_region
        %s175 = ssub.s32 %s13, 1
        %s176 = sand.u32 %s40, 1
        %s177 = scalar_lea.sflag [#allocation5], %s176
        %s178 = sand.u32 %s40, 1
        %s179 = smul.addr %s178, 8
        %s180 = scalar_lea.vmem [#allocation4], %s179
        // Predicated region
        $region29: #{tpu_custom_call.1} parent=27 // pred_check
          %p181 = pneg %p53
        $region30: #{tpu_custom_call.1} parent=27 // pred_check_branch
          %183 = sbr.rel (%p181) target = $region32
        $region31: #{tpu_custom_call.1} parent=27 // pred_region
          %184 = dma.done %s177, 128
        $region32: #{tpu_custom_call.1} parent=27 // pred_fallthru
          _
        %s185 = sand.u32 %s40, 1
        %s186 = scalar_lea.sflag [#allocation5], %s185
        %s187 = sand.u32 %s40, 1
        %s188 = smul.addr %s187, 8
        %s189 = scalar_lea.vmem [#allocation4], %s188
        %p190 = pneg %p53
        %p191 = pneg %p50
        %p192 = pneg %p74
        %p193 = pneg %p71
        %p194 = pneg %p100
        %p195 = pneg %p97
        %p196 = scmp.lt.s32.totalorder %s22, 1
        %s197 = scalar_select %p196, %s22, 1
        %s198 = scalar_lea.vmem %s2, %s197
        %p199 = pneg %p126
        %p200 = pneg %p123
        %p201 = scmp.lt.s32.totalorder %s22, 1
        %s202 = scalar_select %p201, %s22, 1
        %s203 = scalar_lea.vmem %s3, %s202
        %s204 = smul.u32 2, %s23
        %p205 = scmp.lt.s32.totalorder %s22, 1
        %s206 = scalar_select %p205, %s22, 1
        %s207 = scalar_lea.vmem %s2, %s206
        %p208 = scmp.lt.s32.totalorder %s22, 1
        %s209 = scalar_select %p208, %s22, 1
        %s210 = scalar_lea.vmem %s3, %s209
        %p211 = scmp.eq.s32.totalorder %s23, 0
        // Predicated region
        $region33: #{tpu_custom_call.1} parent=27 // pred_check
          %p212 = pneg %p211
        $region34: #{tpu_custom_call.1} parent=27 // pred_check_branch
          %214 = sbr.rel (%p212) target = $region36
        $region35: #{tpu_custom_call.1} parent=27 // pred_region
          %vm215 = vcmask 0
          %216 = vst.msk [vmem:[#allocation2] sm:$0x1] %vm215, 0.0
          %217 = vst.msk [vmem:[#allocation3] sm:$0x1] %vm215, 0.0
        $region36: #{tpu_custom_call.1} parent=27 // pred_fallthru
          _
        %v218 = vld [vmem:[%s180] sm:$0xff]
        %v219 = vld [vmem:[%s1] sm:$0x1]
        %v221 = vcombine.high %v218, %v218
        %vm222 = vcmask 31744
        %v224 = vsel %vm222, %v219, 0
        %vm226 = vcmask 1043456
        %v227 = vsel %vm226, %v218, 0
        %v229 = vsel %vm226, %v221, 0
        %231 = vmatprep.subr.mxu0 0.0
        %232 = vmatpush1.msra.mxu0 0.0
        %233 = vmatprep.subr.mxu0 0.0
        %234 = vmatpush1.msra.mxu0 0.0
        %235 = vmatprep.subr.mxu0 0.0
        %236 = vmatpush1.msra.mxu0 0.0
        %237 = vmatprep.subr.mxu0 0.0
        %238 = vmatpush1.msra.mxu0 0.0
        %239 = vmatprep.subr.mxu0 0.0
        %240 = vmatpush1.msra.mxu0 0.0
        %241 = vmatprep.subr.mxu0 0.0
        %242 = vmatpush1.msra.mxu0 0.0
        %243 = vmatprep.subr.mxu0 0.0
        %244 = vmatpush1.msra.mxu0 0.0
        %245 = vmatprep.subr.mxu0 0.0
        %246 = vmatpush1.msra.mxu0 0.0
        %247 = vmatprep.subr.mxu0 0.0
        %248 = vmatpush1.msra.mxu0 0.0
        %249 = vmatprep.subr.mxu0 0.0
        %250 = vmatpush1.msra.mxu0 0.0
        %251 = vmatprep.subr.mxu0 0.0
        %252 = vmatpush1.msra.mxu0 0.0
        %253 = vmatprep.subr.mxu0 0.0
        %254 = vmatpush1.msra.mxu0 0.0
        %255 = vmatprep.subr.mxu0 0.0
        %256 = vmatpush1.msra.mxu0 0.0
        %257 = vmatprep.subr.mxu0 0.0
        %258 = vmatpush1.msra.mxu0 0.0
        %259 = vmatprep.subr.mxu0 0.0
        %260 = vmatpush1.msra.mxu0 0.0
        %261 = vmatprep.subr.mxu0 %v229
        %262 = vmatpush1.msra.mxu0 %v227
        %263 = vmatprep.subr.mxu0 0.0
        %264 = vmatpush2.msra.mxu0 0.0
        %265 = vmatprep.subr.mxu0 0.0
        %266 = vmatpush2.msra.mxu0 0.0
        %267 = vmatprep.subr.mxu0 0.0
        %268 = vmatpush2.msra.mxu0 0.0
        %269 = vmatprep.subr.mxu0 0.0
        %270 = vmatpush2.msra.mxu0 0.0
        %271 = vmatprep.subr.mxu0 0.0
        %272 = vmatpush2.msra.mxu0 0.0
        %273 = vmatprep.subr.mxu0 0.0
        %274 = vmatpush2.msra.mxu0 0.0
        %275 = vmatprep.subr.mxu0 0.0
        %276 = vmatpush2.msra.mxu0 0.0
        %277 = vmatprep.subr.mxu0 0.0
        %278 = vmatpush2.msra.mxu0 0.0
        %279 = vmatprep.subr.mxu0 0.0
        %280 = vmatpush2.msra.mxu0 0.0
        %281 = vmatprep.subr.mxu0 0.0
        %282 = vmatpush2.msra.mxu0 0.0
        %283 = vmatprep.subr.mxu0 0.0
        %284 = vmatpush2.msra.mxu0 0.0
        %285 = vmatprep.subr.mxu0 0.0
        %286 = vmatpush2.msra.mxu0 0.0
        %287 = vmatprep.subr.mxu0 0.0
        %288 = vmatpush2.msra.mxu0 0.0
        %289 = vmatprep.subr.mxu0 0.0
        %290 = vmatpush2.msra.mxu0 0.0
        %291 = vmatprep.subr.mxu0 0.0
        %292 = vmatpush2.msra.mxu0 0.0
        %293 = vmatprep.subr.mxu0 0.0
        %294 = vmatpush2.msra.mxu0 0.0
        %295 = vmatprep.mubr.f32.mxu0 0.0
        %296 = vmatmul.mubr.f32.gmra.mxu0 %v224
        %v297 = vpop.f32.mrf.mxu0
        %v298 = vadd.f32 0.0, %v297
        %v299 = vpop.f32.mrf.mxu0
        %v300 = vadd.f32 0.0, %v299
        %301 = vdwg.mxu0
        %v302 = vld [vmem:[#allocation2] sm:$0x1]
        %vm303 = vcmask 1040384
        %v304 = vsel %vm303, %v298, 0.0
        %v305 = vsel %vm303, %v300, 0.0
        %v306 = vadd.f32 %v304, %v305
        %307 = vadd.xlane.f32.xlu0 %v306
        %v308 = vpop.xlane.xlu0 %307
        %v309 = vadd.f32 %v302, %v308
        %vm310 = vcmask 0
        %311 = vst.msk [vmem:[#allocation2] sm:$0x1] %vm310, %v309
        %v312 = vld [vmem:[#allocation3] sm:$0x1]
        %v313 = vmul.f32 %v298, %v298
        %v314 = vmul.f32 %v300, %v300
        %v315 = vsel %vm303, %v313, 0.0
        %v316 = vsel %vm303, %v314, 0.0
        %v317 = vadd.f32 %v315, %v316
        %318 = vadd.xlane.f32.xlu0 %v317
        %v319 = vpop.xlane.xlu0 %318
        %v320 = vadd.f32 %v312, %v319
        %321 = vst.msk [vmem:[#allocation3] sm:$0x1] %vm310, %v320
        // Predicated region
        $region37: #{tpu_custom_call.1} parent=27 // pred_check
          %p322 = pneg %p211
        $region38: #{tpu_custom_call.1} parent=27 // pred_check_branch
          %324 = sbr.rel (%p322) target = $region40
        $region39: #{tpu_custom_call.1} parent=27 // pred_region
          %v325 = vld [vmem:[#allocation2] sm:$0x1]
          %326 = vst.msk [vmem:[%s207] sm:$0x1] %vm310, %v325
          %v327 = vld [vmem:[#allocation3] sm:$0x1]
          %328 = vst.msk [vmem:[%s210] sm:$0x1] %vm310, %v327
        $region40: #{tpu_custom_call.1} parent=27 // pred_fallthru
          _
        %p329 = scmp.lt.s32.totalorder %s22, 1
        %s330 = scalar_select %p329, %s22, 1
        %s331 = scalar_lea.vmem %s2, %s330
        %p332 = scmp.lt.s32.totalorder %s22, 1
        %s333 = scalar_select %p332, %s22, 1
        %s334 = scalar_lea.vmem %s3, %s333
        // Predicated region
        $region41: #{tpu_custom_call.1} parent=27 // pred_check
          %p335 = pneg %p97
        $region42: #{tpu_custom_call.1} parent=27 // pred_check_branch
          %337 = sbr.rel (%p335) target = $region44
        $region43: #{tpu_custom_call.1} parent=27 // pred_region
          _
        $region44: #{tpu_custom_call.1} parent=27 // pred_fallthru
          _
        // Predicated region
        $region45: #{tpu_custom_call.1} parent=27 // pred_check
          %p338 = pneg %p123
        $region46: #{tpu_custom_call.1} parent=27 // pred_check_branch
          %340 = sbr.rel (%p338) target = $region48
        $region47: #{tpu_custom_call.1} parent=27 // pred_region
          _
        $region48: #{tpu_custom_call.1} parent=27 // pred_fallthru
          _
      $region28: #{tpu_custom_call.1} parent=5 // pred_fallthru
        _
      %p341 = scmp.le.s32.totalorder 2, %s13
      // Predicated region
      $region49: #{tpu_custom_call.1} parent=5 // pred_check
        %p342 = pneg %p341
      $region50: #{tpu_custom_call.1} parent=5 // pred_check_branch
        %344 = sbr.rel (%p342) target = $region52
      $region51: #{tpu_custom_call.1} parent=5 // pred_region
        %s345 = ssub.s32 %s13, 2
        // Predicated region
        $region53: #{tpu_custom_call.1} parent=51 // pred_check
          %p346 = pneg %p103
        $region54: #{tpu_custom_call.1} parent=51 // pred_check_branch
          %348 = sbr.rel (%p346) target = $region56
        $region55: #{tpu_custom_call.1} parent=51 // pred_region
          %p349 = scmp.lt.s32.totalorder %s24, 1
          %s350 = scalar_select %p349, %s24, 1
          %s351 = scalar_lea.vmem %s2, %s350
        $region56: #{tpu_custom_call.1} parent=51 // pred_fallthru
          _
        // Predicated region
        $region57: #{tpu_custom_call.1} parent=51 // pred_check
          %p352 = pneg %p129
        $region58: #{tpu_custom_call.1} parent=51 // pred_check_branch
          %354 = sbr.rel (%p352) target = $region60
        $region59: #{tpu_custom_call.1} parent=51 // pred_region
          %p355 = scmp.lt.s32.totalorder %s24, 1
          %s356 = scalar_select %p355, %s24, 1
          %s357 = scalar_lea.vmem %s3, %s356
        $region60: #{tpu_custom_call.1} parent=51 // pred_fallthru
          _
      $region52: #{tpu_custom_call.1} parent=5 // pred_fallthru
        _
    $region6: #{tpu_custom_call.1} parent=1 // loop_footer
      %s17 = sadd.s32 1, %s13
    $region7: #{tpu_custom_call.1} parent=1 // loop_footer_branch
      %12 = sbr.rel target = $region3
    $region8: #{tpu_custom_call.1} parent=1 // loop_exit
      _
    %358 = vsyncpa [#allocation5], 1
    %s359 = scalar_lea.sflag [#allocation5], 1
    %360 = vsyncpa %s359, 1

</llo_original>
